<compile_context>
chip_gen: v7x
topology: tpu7x:2x2x1
jax: 0.10.0
libtpu: 0.0.40
codegen_flags: <defaults>
</compile_context>

<pallas_src>
import jax
import jax.numpy as jnp
from jax.experimental import pallas as pl
from jax.experimental.pallas import tpu as pltpu


def _round_up(x, m):
    return ((x + m - 1) // m) * m


def _cdiv(a, b):
    return (a + b - 1) // b


# --------------------------------------------------------------------------
# Kernel body: one row tile (TM, C_pad) -> (TM, K_pad) softmax probs.
# --------------------------------------------------------------------------
def mlp_kernel(x_ref, w1_ref, b1_ref, w2_ref, b2_ref, o_ref):
    x = x_ref[...]

    # fc1 + ReLU (MXU matmul, f32 accumulate; bias/ReLU in f32).
    h = jnp.dot(x, w1_ref[...], preferred_element_type=jnp.float32) + b1_ref[...]
    h = jnp.maximum(h, 0.0)

    # fc2 (padded class columns carry a -1e30 bias -> exp underflows to 0).
    logits = (
        jnp.dot(h.astype(w2_ref.dtype), w2_ref[...],
                preferred_element_type=jnp.float32)
        + b2_ref[...]
    )

    # Numerically-stable softmax over the last dim; divide goes to the EUP.
    m = jnp.max(logits, axis=-1, keepdims=True)
    e = jnp.exp(logits - m)
    denom = jnp.sum(e, axis=-1, keepdims=True)
    o_ref[...] = (e * pl.reciprocal(denom, approx=True)).astype(o_ref.dtype)


# --------------------------------------------------------------------------
# Parameter padding (do once, outside the per-call path).
# --------------------------------------------------------------------------
def pad_params(w1, b1, w2, b2, *, compute_dtype=jnp.bfloat16):
    """Pad weights to lane-aligned shapes once.  w1:(C,C) b1:(1,C) w2:(C,K) b2:(1,K)."""
    C = w1.shape[0]
    K = w2.shape[-1]
    LANE = 128
    C_pad = _round_up(C, LANE)
    K_pad = _round_up(K, LANE)
    cdt = jnp.dtype(compute_dtype)

    w1_p = jnp.zeros((C_pad, C_pad), cdt).at[:C, :C].set(w1.astype(cdt))
    b1_p = jnp.zeros((1, C_pad), jnp.float32).at[:, :C].set(
        b1.reshape(1, C).astype(jnp.float32))
    w2_p = jnp.zeros((C_pad, K_pad), cdt).at[:C, :K].set(w2.astype(cdt))
    # Bake a large negative bias into padded class columns so they get zero
    # probability -- no in-kernel iota / mask needed.
    b2_p = jnp.full((1, K_pad), -1e30, jnp.float32).at[:, :K].set(
        b2.reshape(1, K).astype(jnp.float32))

    return {
        "w1": w1_p, "b1": b1_p, "w2": w2_p, "b2": b2_p,
        "channels": C, "num_classes": K, "compute_dtype": cdt,
    }


def _vmem_limit_bytes():
    # ~56 MiB on v7x (64 MiB physical per TC), up to 100 MiB on v5e/v6e.
    cap = 64 * 1024 * 1024
    try:
        info = pltpu.get_tpu_info()
        cap = int(getattr(info, "vmem_capacity_bytes", cap))
    except Exception:
        pass
    return int(min(cap - (8 << 20), 100 * 1024 * 1024))


def _choose_row_tiling(M, tm):
    """Pick (TM, M_pad, n_tiles) minimizing padding; keep >=2 grid steps when possible."""
    SUB = 8
    M_aligned = _round_up(max(M, 1), SUB)
    n_tiles = max(1, _cdiv(M_aligned, tm))
    # Ensure at least 2 grid steps so the "parallel" axis can shard rows
    # across v7x's 2 TensorCores.
    if n_tiles < 2 and M_aligned >= 2 * SUB:
        n_tiles = 2
    TM = _round_up(_cdiv(M_aligned, n_tiles), SUB)
    M_pad = TM * n_tiles
    return TM, M_pad, n_tiles


def _pallas_mlp(x_p, w1_p, b1_p, w2_p, b2_p, *, TM, n_tiles, out_dtype,
                single_buffer_weights):
    M_pad, C_pad = x_p.shape
    K_pad = w2_p.shape[1]
    cdt = x_p.dtype

    if single_buffer_weights:
        w_mode = pl.Buffered(1)   # constant index_map -> one VMEM buffer suffices
    else:
        w_mode = None

    flops = 2 * M_pad * C_pad * (C_pad + K_pad)
    bytes_accessed = (
        (x_p.size + w1_p.size + w2_p.size) * jnp.dtype(cdt).itemsize
        + (b1_p.size + b2_p.size) * 4
        + M_pad * K_pad * jnp.dtype(out_dtype).itemsize
    )

    return pl.pallas_call(
        mlp_kernel,
        out_shape=jax.ShapeDtypeStruct((M_pad, K_pad), out_dtype),
        grid_spec=pltpu.PrefetchScalarGridSpec(
            num_scalar_prefetch=0,
            grid=(n_tiles,),
            in_specs=[
                pl.BlockSpec((TM, C_pad), lambda i: (i, 0)),              # x walks rows
                pl.BlockSpec((C_pad, C_pad), lambda i: (0, 0), pipeline_mode=w_mode),
                pl.BlockSpec((1, C_pad), lambda i: (0, 0), pipeline_mode=w_mode),
                pl.BlockSpec((C_pad, K_pad), lambda i: (0, 0), pipeline_mode=w_mode),
                pl.BlockSpec((1, K_pad), lambda i: (0, 0), pipeline_mode=w_mode),
            ],
            out_specs=pl.BlockSpec((TM, K_pad), lambda i: (i, 0)),
        ),
        compiler_params=pltpu.CompilerParams(
            dimension_semantics=("parallel",),
            vmem_limit_bytes=_vmem_limit_bytes(),
        ),
        cost_estimate=pl.CostEstimate(
            flops=flops,
            transcendentals=M_pad * K_pad,
            bytes_accessed=bytes_accessed,
        ),
    )(x_p, w1_p, b1_p, w2_p, b2_p)


def mlp_forward(x, params, *, tm=1024, out_dtype=None):
    """x: (..., C). params: from pad_params(). Returns softmax probs (..., K)."""
    C = params["channels"]
    K = params["num_classes"]
    cdt = params["compute_dtype"]
    w1_p, b1_p, w2_p, b2_p = params["w1"], params["b1"], params["w2"], params["b2"]
    C_pad = w1_p.shape[0]
    K_pad = w2_p.shape[1]
    assert x.shape[-1] == C

    lead = x.shape[:-1]
    x2d = x.reshape(-1, C)
    M = x2d.shape[0]

    TM, M_pad, n_tiles = _choose_row_tiling(M, tm)
    out_dtype = x.dtype if out_dtype is None else jnp.dtype(out_dtype)

    x2d = x2d.astype(cdt)
    if M_pad == M and C_pad == C:
        x_p = x2d                                           # fast path: no pad copy
    else:
        x_p = jnp.zeros((M_pad, C_pad), cdt).at[:M, :C].set(x2d)

    try:
        out = _pallas_mlp(x_p, w1_p, b1_p, w2_p, b2_p, TM=TM, n_tiles=n_tiles,
                          out_dtype=out_dtype, single_buffer_weights=True)
    except Exception:
        # Fallback for JAX versions that reject single-buffer pipeline_mode.
        out = _pallas_mlp(x_p, w1_p, b1_p, w2_p, b2_p, TM=TM, n_tiles=n_tiles,
                          out_dtype=out_dtype, single_buffer_weights=False)

    return out[:M, :K].reshape(*lead, K)


def init_params(key, channels, out_classes):
    """Deterministic synthetic parameters (shapes/init match nn.Linear)."""
    k1, k2, k3, k4 = jax.random.split(key, 4)
    # PyTorch stores W as (out, in); we keep the transpose (in, out).
    lim1 = 1.0 / jnp.sqrt(channels)
    w1 = jax.random.uniform(k1, (channels, channels), jnp.float32, -lim1, lim1)
    b1 = jax.random.uniform(k2, (1, channels), jnp.float32, -lim1, lim1)
    w2 = jax.random.uniform(k3, (channels, out_classes), jnp.float32, -lim1, lim1)
    b2 = jax.random.uniform(k4, (1, out_classes), jnp.float32, -lim1, lim1)
    return w1, b1, w2, b2


if __name__ == "__main__":
    B, T, C, K = 2, 8, 32, 7   # small shapes consistent with the module
    key = jax.random.PRNGKey(0)
    kx, kp = jax.random.split(key)
    x = jax.random.normal(kx, (B, T, C), dtype=jnp.float32)
    w1, b1, w2, b2 = init_params(kp, C, K)

    params = pad_params(w1, b1, w2, b2)            # bf16 compute, padded once
    probs = mlp_forward(x, params)
    probs = jax.block_until_ready(probs)

    # Reference in plain JAX with matching bf16 matmul inputs / f32 accumulate.
    bf = jnp.bfloat16
    h_ref = jnp.maximum(
        jnp.dot(x.astype(bf), w1.astype(bf), preferred_element_type=jnp.float32)
        + b1[0], 0.0)
    logits_ref = (
        jnp.dot(h_ref.astype(bf), w2.astype(bf), preferred_element_type=jnp.float32)
        + b2[0])
    ref = jax.nn.softmax(logits_ref, axis=-1)

    probs_f32 = probs.astype(jnp.float32)
    assert probs.shape == (B, T, K)
    assert jnp.allclose(probs_f32, ref, atol=5e-3, rtol=5e-3)
    assert jnp.allclose(jnp.sum(probs_f32, axis=-1), 1.0, atol=1e-2)
    assert bool(jnp.all(jnp.isfinite(probs_f32)))

    print("KERNEL_OK")
</pallas_src>

<mosaic_0001>
module attributes {stable_mosaic.version = 11 : i64} {
  func.func @mlp_kernel(%arg0: i32, %arg1: memref<8x128xbf16, #tpu.memory_space<vmem>>, %arg2: memref<128x128xbf16, #tpu.memory_space<vmem>>, %arg3: memref<1x128xf32, #tpu.memory_space<vmem>>, %arg4: memref<128x128xbf16, #tpu.memory_space<vmem>>, %arg5: memref<1x128xf32, #tpu.memory_space<vmem>>, %arg6: memref<8x128xf32, #tpu.memory_space<vmem>>) attributes {dimension_semantics = [#tpu.dimension_semantics<parallel>], iteration_bounds = array<i64: 2>, scalar_prefetch = 0 : i64, scratch_operands = 0 : i64, tpu.core_type = #tpu.core_type<tc>, window_params = [{transform_indices = @transform_0, window_bounds = array<i64: 8, 128>}, {pipeline_mode = #tpu.pipeline_mode<synchronous>, transform_indices = @transform_1, window_bounds = array<i64: 128, 128>}, {pipeline_mode = #tpu.pipeline_mode<synchronous>, transform_indices = @transform_2, window_bounds = array<i64: 1, 128>}, {pipeline_mode = #tpu.pipeline_mode<synchronous>, transform_indices = @transform_3, window_bounds = array<i64: 128, 128>}, {pipeline_mode = #tpu.pipeline_mode<synchronous>, transform_indices = @transform_4, window_bounds = array<i64: 1, 128>}, {transform_indices = @transform_5, window_bounds = array<i64: 8, 128>}]} {
    %c0 = arith.constant 0 : index
    %c0_0 = arith.constant 0 : index
    %0 = vector.load %arg1[%c0, %c0_0] : memref<8x128xbf16, #tpu.memory_space<vmem>>, vector<8x128xbf16>
    %c0_1 = arith.constant 0 : index
    %c0_2 = arith.constant 0 : index
    %1 = vector.load %arg2[%c0_1, %c0_2] : memref<128x128xbf16, #tpu.memory_space<vmem>>, vector<128x128xbf16>
    %cst = arith.constant dense<0.000000e+00> : vector<8x128xf32>
    %2 = tpu.matmul %0, %1, %cst {dimension_numbers = #tpu.dot_dimension_numbers<[1], [0], [0], [1], [0, 0, 1, 1], [], []>} : vector<8x128xbf16>, vector<128x128xbf16>, vector<8x128xf32> -> vector<8x128xf32>
    %c0_3 = arith.constant 0 : index
    %c0_4 = arith.constant 0 : index
    %3 = vector.load %arg3[%c0_3, %c0_4] : memref<1x128xf32, #tpu.memory_space<vmem>>, vector<1x128xf32>
    %4 = vector.broadcast %3 : vector<1x128xf32> to vector<8x128xf32>
    %5 = arith.addf %2, %4 : vector<8x128xf32>
    %cst_5 = arith.constant 0.000000e+00 : f32
    %6 = vector.broadcast %cst_5 : f32 to vector<8x128xf32>
    %7 = arith.maximumf %5, %6 : vector<8x128xf32>
    %8 = arith.truncf %7 : vector<8x128xf32> to vector<8x128xbf16>
    %c0_6 = arith.constant 0 : index
    %c0_7 = arith.constant 0 : index
    %9 = vector.load %arg4[%c0_6, %c0_7] : memref<128x128xbf16, #tpu.memory_space<vmem>>, vector<128x128xbf16>
    %cst_8 = arith.constant dense<0.000000e+00> : vector<8x128xf32>
    %10 = tpu.matmul %8, %9, %cst_8 {dimension_numbers = #tpu.dot_dimension_numbers<[1], [0], [0], [1], [0, 0, 1, 1], [], []>} : vector<8x128xbf16>, vector<128x128xbf16>, vector<8x128xf32> -> vector<8x128xf32>
    %c0_9 = arith.constant 0 : index
    %c0_10 = arith.constant 0 : index
    %11 = vector.load %arg5[%c0_9, %c0_10] : memref<1x128xf32, #tpu.memory_space<vmem>>, vector<1x128xf32>
    %12 = vector.broadcast %11 : vector<1x128xf32> to vector<8x128xf32>
    %13 = arith.addf %10, %12 : vector<8x128xf32>
    %cst_11 = arith.constant dense<0xFF800000> : vector<8xf32>
    %14 = vector.multi_reduction <maximumf>, %13, %cst_11 [1] : vector<8x128xf32> to vector<8xf32>
    %15 = vector.shape_cast %14 : vector<8xf32> to vector<8x1xf32>
    %16 = vector.broadcast %15 : vector<8x1xf32> to vector<8x128xf32>
    %17 = arith.subf %13, %16 : vector<8x128xf32>
    %18 = math.exp %17 : vector<8x128xf32>
    %cst_12 = arith.constant dense<0.000000e+00> : vector<8xf32>
    %19 = vector.multi_reduction <add>, %18, %cst_12 [1] : vector<8x128xf32> to vector<8xf32>
    %20 = vector.shape_cast %19 : vector<8xf32> to vector<8x1xf32>
    %21 = tpu.reciprocal %20 {approx = true} : vector<8x1xf32> -> vector<8x1xf32>
    %22 = vector.broadcast %21 : vector<8x1xf32> to vector<8x128xf32>
    %23 = arith.mulf %18, %22 : vector<8x128xf32>
    %c0_13 = arith.constant 0 : index
    %c0_14 = arith.constant 0 : index
    %24 = vector.load %arg6[%c0_13, %c0_14] : memref<8x128xf32, #tpu.memory_space<vmem>>, vector<8x128xf32>
    tpu.vector_store %arg6[%c0_13, %c0_14], %23 {strides = array<i32>} : memref<8x128xf32, #tpu.memory_space<vmem>>, vector<8x128xf32>,
    return
  }
  func.func @transform_0(%arg0: i32) -> (i32, i32) {
    %c0_i32 = arith.constant 0 : i32
    %c0_i32_0 = arith.constant 0 : i32
    return %arg0, %c0_i32 : i32, i32
  }
  func.func @transform_1(%arg0: i32) -> (i32, i32) {
    %c0_i32 = arith.constant 0 : i32
    %c0_i32_0 = arith.constant 0 : i32
    %c0_i32_1 = arith.constant 0 : i32
    return %c0_i32, %c0_i32_0 : i32, i32
  }
  func.func @transform_2(%arg0: i32) -> (i32, i32) {
    %c0_i32 = arith.constant 0 : i32
    %c0_i32_0 = arith.constant 0 : i32
    %c0_i32_1 = arith.constant 0 : i32
    return %c0_i32, %c0_i32_0 : i32, i32
  }
  func.func @transform_3(%arg0: i32) -> (i32, i32) {
    %c0_i32 = arith.constant 0 : i32
    %c0_i32_0 = arith.constant 0 : i32
    %c0_i32_1 = arith.constant 0 : i32
    return %c0_i32, %c0_i32_0 : i32, i32
  }
  func.func @transform_4(%arg0: i32) -> (i32, i32) {
    %c0_i32 = arith.constant 0 : i32
    %c0_i32_0 = arith.constant 0 : i32
    %c0_i32_1 = arith.constant 0 : i32
    return %c0_i32, %c0_i32_0 : i32, i32
  }
  func.func @transform_5(%arg0: i32) -> (i32, i32) {
    %c0_i32 = arith.constant 0 : i32
    %c0_i32_0 = arith.constant 0 : i32
    return %arg0, %c0_i32 : i32, i32
  }
}

module attributes {stable_mosaic.version = 11 : i64} {
  func.func @mlp_kernel(%arg0: i32, %arg1: memref<8x128xbf16, #tpu.memory_space<vmem>>, %arg2: memref<128x128xbf16, #tpu.memory_space<vmem>>, %arg3: memref<1x128xf32, #tpu.memory_space<vmem>>, %arg4: memref<128x128xbf16, #tpu.memory_space<vmem>>, %arg5: memref<1x128xf32, #tpu.memory_space<vmem>>, %arg6: memref<8x128xf32, #tpu.memory_space<vmem>>) attributes {dimension_semantics = [#tpu.dimension_semantics<parallel>], iteration_bounds = array<i64: 2>, scalar_prefetch = 0 : i64, scratch_operands = 0 : i64, tpu.core_type = #tpu.core_type<tc>, window_params = [{transform_indices = @transform_0, window_bounds = array<i64: 8, 128>}, {pipeline_mode = #tpu.pipeline_mode<synchronous>, transform_indices = @transform_1, window_bounds = array<i64: 128, 128>}, {pipeline_mode = #tpu.pipeline_mode<synchronous>, transform_indices = @transform_2, window_bounds = array<i64: 1, 128>}, {pipeline_mode = #tpu.pipeline_mode<synchronous>, transform_indices = @transform_3, window_bounds = array<i64: 128, 128>}, {pipeline_mode = #tpu.pipeline_mode<synchronous>, transform_indices = @transform_4, window_bounds = array<i64: 1, 128>}, {transform_indices = @transform_5, window_bounds = array<i64: 8, 128>}]} {
    %c0 = arith.constant 0 : index
    %c0_0 = arith.constant 0 : index
    %0 = vector.load %arg1[%c0, %c0_0] : memref<8x128xbf16, #tpu.memory_space<vmem>>, vector<8x128xbf16>
    %c0_1 = arith.constant 0 : index
    %c0_2 = arith.constant 0 : index
    %1 = vector.load %arg2[%c0_1, %c0_2] : memref<128x128xbf16, #tpu.memory_space<vmem>>, vector<128x128xbf16>
    %cst = arith.constant dense<0.000000e+00> : vector<8x128xf32>
    %2 = tpu.matmul %0, %1, %cst {dimension_numbers = #tpu.dot_dimension_numbers<[1], [0], [0], [1], [0, 0, 1, 1], [], []>} : vector<8x128xbf16>, vector<128x128xbf16>, vector<8x128xf32> -> vector<8x128xf32>
    %c0_3 = arith.constant 0 : index
    %c0_4 = arith.constant 0 : index
    %3 = vector.load %arg3[%c0_3, %c0_4] : memref<1x128xf32, #tpu.memory_space<vmem>>, vector<1x128xf32>
    %4 = vector.broadcast %3 : vector<1x128xf32> to vector<8x128xf32>
    %5 = arith.addf %2, %4 : vector<8x128xf32>
    %cst_5 = arith.constant 0.000000e+00 : f32
    %6 = vector.broadcast %cst_5 : f32 to vector<8x128xf32>
    %7 = arith.maximumf %5, %6 : vector<8x128xf32>
    %8 = arith.truncf %7 : vector<8x128xf32> to vector<8x128xbf16>
    %c0_6 = arith.constant 0 : index
    %c0_7 = arith.constant 0 : index
    %9 = vector.load %arg4[%c0_6, %c0_7] : memref<128x128xbf16, #tpu.memory_space<vmem>>, vector<128x128xbf16>
    %cst_8 = arith.constant dense<0.000000e+00> : vector<8x128xf32>
    %10 = tpu.matmul %8, %9, %cst_8 {dimension_numbers = #tpu.dot_dimension_numbers<[1], [0], [0], [1], [0, 0, 1, 1], [], []>} : vector<8x128xbf16>, vector<128x128xbf16>, vector<8x128xf32> -> vector<8x128xf32>
    %c0_9 = arith.constant 0 : index
    %c0_10 = arith.constant 0 : index
    %11 = vector.load %arg5[%c0_9, %c0_10] : memref<1x128xf32, #tpu.memory_space<vmem>>, vector<1x128xf32>
    %12 = vector.broadcast %11 : vector<1x128xf32> to vector<8x128xf32>
    %13 = arith.addf %10, %12 : vector<8x128xf32>
    %cst_11 = arith.constant dense<0xFF800000> : vector<8xf32>
    %14 = vector.multi_reduction <maximumf>, %13, %cst_11 [1] : vector<8x128xf32> to vector<8xf32>
    %15 = vector.shape_cast %14 : vector<8xf32> to vector<8x1xf32>
    %16 = vector.broadcast %15 : vector<8x1xf32> to vector<8x128xf32>
    %17 = arith.subf %13, %16 : vector<8x128xf32>
    %18 = math.exp %17 : vector<8x128xf32>
    %cst_12 = arith.constant dense<0.000000e+00> : vector<8xf32>
    %19 = vector.multi_reduction <add>, %18, %cst_12 [1] : vector<8x128xf32> to vector<8xf32>
    %20 = vector.shape_cast %19 : vector<8xf32> to vector<8x1xf32>
    %21 = tpu.reciprocal %20 {approx = true} : vector<8x1xf32> -> vector<8x1xf32>
    %22 = vector.broadcast %21 : vector<8x1xf32> to vector<8x128xf32>
    %23 = arith.mulf %18, %22 : vector<8x128xf32>
    %c0_13 = arith.constant 0 : index
    %c0_14 = arith.constant 0 : index
    %24 = vector.load %arg6[%c0_13, %c0_14] : memref<8x128xf32, #tpu.memory_space<vmem>>, vector<8x128xf32>
    tpu.vector_store %arg6[%c0_13, %c0_14], %23 {strides = array<i32>} : memref<8x128xf32, #tpu.memory_space<vmem>>, vector<8x128xf32>,
    return
  }
  func.func @transform_0(%arg0: i32) -> (i32, i32) {
    %c0_i32 = arith.constant 0 : i32
    %c0_i32_0 = arith.constant 0 : i32
    return %arg0, %c0_i32 : i32, i32
  }
  func.func @transform_1(%arg0: i32) -> (i32, i32) {
    %c0_i32 = arith.constant 0 : i32
    %c0_i32_0 = arith.constant 0 : i32
    %c0_i32_1 = arith.constant 0 : i32
    return %c0_i32, %c0_i32_0 : i32, i32
  }
  func.func @transform_2(%arg0: i32) -> (i32, i32) {
    %c0_i32 = arith.constant 0 : i32
    %c0_i32_0 = arith.constant 0 : i32
    %c0_i32_1 = arith.constant 0 : i32
    return %c0_i32, %c0_i32_0 : i32, i32
  }
  func.func @transform_3(%arg0: i32) -> (i32, i32) {
    %c0_i32 = arith.constant 0 : i32
    %c0_i32_0 = arith.constant 0 : i32
    %c0_i32_1 = arith.constant 0 : i32
    return %c0_i32, %c0_i32_0 : i32, i32
  }
  func.func @transform_4(%arg0: i32) -> (i32, i32) {
    %c0_i32 = arith.constant 0 : i32
    %c0_i32_0 = arith.constant 0 : i32
    %c0_i32_1 = arith.constant 0 : i32
    return %c0_i32, %c0_i32_0 : i32, i32
  }
  func.func @transform_5(%arg0: i32) -> (i32, i32) {
    %c0_i32 = arith.constant 0 : i32
    %c0_i32_0 = arith.constant 0 : i32
    return %arg0, %c0_i32 : i32, i32
  }
}

</mosaic_0001>

<llo_original>
// kernel: tpu_custom_call.1
$region0: #{tpu_custom_call.1}
  #allocation0 [shape = 'u32[]', space=smem, size = 0x4, offset = 0x4, fixed_abs, tag = 'smem constant byte address 0x4 - core index']
  #allocation1 [shape = 'u32[144,128]{1,0:T(1,128)}', space=vmem, size = 0x12000, scoped, tag = 'internal scratch']
  %s0 = inlined_call_operand.hbm [shape: bf16[16,128], index: 0, kind: input, shape index: {}]
  %s1 = inlined_call_operand.hbm [shape: bf16[128,128], index: 1, kind: input, shape index: {}]
  %s2 = inlined_call_operand.vmem [shape: f32[1,128], index: 2, kind: input, shape index: {}]
  %s3 = inlined_call_operand.hbm [shape: bf16[128,128], index: 3, kind: input, shape index: {}]
  %s4 = inlined_call_operand.vmem [shape: f32[1,128], index: 4, kind: input, shape index: {}]
  %s5 = inlined_call_operand.hbm [shape: f32[16,128], index: 5, kind: output, shape index: {}]
  %s6 = sld [smem:[#allocation0]]
  $region65: #{tpu_custom_call.1} parent=0
    _
  %s8 = ssub.s32 1, %s6
  %s9 = scalar_select 0, %s8, %s6
  $region1: #{tpu_custom_call.1} parent=0
    #allocation2 [shape = 'u8[4096]{0}', space=vmem, size = 0x1000, scoped, tag = 'input window, operand 0']
    #allocation3 [shape = 's32[2]{0}', space=sflag, size = 0x8, scoped, tag = 'scoped memory for tpu_custom_call.1']
    #allocation4 [shape = 's32[2]{0}', space=sflag, size = 0x8, scoped, tag = 'scoped memory for tpu_custom_call.1']
    #allocation5 [shape = 'u8[32768]{0}', space=vmem, size = 0x8000, scoped, tag = 'input window, operand 1, single buffered']
    #allocation6 [shape = 's32[1]{0}', space=sflag, size = 0x4, scoped, tag = 'scoped memory for tpu_custom_call.1']
    #allocation7 [shape = 'u8[32768]{0}', space=vmem, size = 0x8000, scoped, tag = 'input window, operand 3, single buffered']
    #allocation8 [shape = 'u8[8192]{0}', space=vmem, size = 0x2000, scoped, tag = 'output window, operand 0']
    %10 = vsyncpa [#allocation3], 0
    %s11 = scalar_lea.sflag [#allocation3], 1
    %12 = vsyncpa %s11, 0
    %13 = vsyncpa [#allocation6], 0
    %14 = vsyncpa [#allocation4], 0
    %s15 = scalar_lea.sflag [#allocation4], 1
    %16 = vsyncpa %s15, 0
    loop: start=0, step=1, limit=4
    $region2: #{tpu_custom_call.1} parent=1 // loop_pre_header
      _
    $region3: #{tpu_custom_call.1} parent=1 // loop_header
      %s18 = sphi 0, %s22
      %p19 = scmp.ge.s32.totalorder %s18, 4
      %s28 = sphi 0, %s30
      %s31 = sphi 0, %s28
      %s32 = sphi 0, %s31
      %s48 = sphi 0, %s32
      %s52 = sphi 0, %s52
      %s54 = sphi 0, %s52
      %s55 = sphi 0, %s54
      %s69 = sphi 0, %s55
      %s73 = sphi 0, %s73
      %s75 = sphi 0, %s73
      %s76 = sphi 0, %s75
      %s90 = sphi 0, %s76
      %s94 = sphi 0, %s94
      %s96 = sphi 0, %s94
      %s97 = sphi 0, %s96
      %s111 = sphi 0, %s97
      %s115 = sphi 0, %s115
      %s117 = sphi 0, %s115
      %s118 = sphi 0, %s117
      %s132 = sphi 0, %s118
      %s138 = sphi 0, %s140
      %s141 = sphi 0, %s138
      %s142 = sphi 0, %s141
      %s158 = sphi 0, %s142
    $region4: #{tpu_custom_call.1} parent=1 // loop_header_branch
      %21 = sbr.rel (%p19) target = $region8
    $region5: #{tpu_custom_call.1} parent=1 // loop_body
      %s23 = ssub.s32 %s18, 1
      %s24 = ssub.s32 %s18, 2
      %s25 = sadd.s32 %s18, 1
      %s26 = ssub.s32 %s18, %s25
      %p27 = scmp.eq.s32.totalorder %s26, 0
      %s29 = sadd.s32 %s28, 1
      %s30 = scalar_select %p27, %s28, %s29
      %p33 = pneg %p27
      %p34 = scmp.eq.s32.totalorder %s18, 1
      %p35 = por %p33, %p34
      %p36 = scmp.ne.s32.totalorder %s28, %s31
      %p37 = scmp.eq.s32.totalorder %s18, 0
      %p38 = por %p36, %p37
      %p39 = scmp.ne.s32.totalorder %s28, %s31
      %p40 = scmp.eq.s32.totalorder %s23, 1
      %p41 = por %p39, %p40
      %p42 = scmp.ne.s32.totalorder %s31, %s32
      %p43 = scmp.eq.s32.totalorder %s23, 0
      %p44 = por %p42, %p43
      %p45 = scmp.ne.s32.totalorder %s31, %s32
      %p46 = scmp.eq.s32.totalorder %s24, 1
      %p47 = por %p45, %p46
      %p49 = scmp.ne.s32.totalorder %s32, %s48
      %p50 = scmp.eq.s32.totalorder %s24, 0
      %p51 = por %p49, %p50
      %s53 = sadd.s32 %s52, 1
      %p56 = scmp.eq.s32.totalorder %s18, 1
      %p57 = scmp.ne.s32.totalorder %s52, %s54
      %p58 = scmp.eq.s32.totalorder %s18, 0
      %p59 = por %p57, %p58
      %p60 = scmp.ne.s32.totalorder %s52, %s54
      %p61 = scmp.eq.s32.totalorder %s23, 1
      %p62 = por %p60, %p61
      %p63 = scmp.ne.s32.totalorder %s54, %s55
      %p64 = scmp.eq.s32.totalorder %s23, 0
      %p65 = por %p63, %p64
      %p66 = scmp.ne.s32.totalorder %s54, %s55
      %p67 = scmp.eq.s32.totalorder %s24, 1
      %p68 = por %p66, %p67
      %p70 = scmp.ne.s32.totalorder %s55, %s69
      %p71 = scmp.eq.s32.totalorder %s24, 0
      %p72 = por %p70, %p71
      %s74 = sadd.s32 %s73, 1
      %p77 = scmp.eq.s32.totalorder %s18, 1
      %p78 = scmp.ne.s32.totalorder %s73, %s75
      %p79 = scmp.eq.s32.totalorder %s18, 0
      %p80 = por %p78, %p79
      %p81 = scmp.ne.s32.totalorder %s73, %s75
      %p82 = scmp.eq.s32.totalorder %s23, 1
      %p83 = por %p81, %p82
      %p84 = scmp.ne.s32.totalorder %s75, %s76
      %p85 = scmp.eq.s32.totalorder %s23, 0
      %p86 = por %p84, %p85
      %p87 = scmp.ne.s32.totalorder %s75, %s76
      %p88 = scmp.eq.s32.totalorder %s24, 1
      %p89 = por %p87, %p88
      %p91 = scmp.ne.s32.totalorder %s76, %s90
      %p92 = scmp.eq.s32.totalorder %s24, 0
      %p93 = por %p91, %p92
      %s95 = sadd.s32 %s94, 1
      %p98 = scmp.eq.s32.totalorder %s18, 1
      %p99 = scmp.ne.s32.totalorder %s94, %s96
      %p100 = scmp.eq.s32.totalorder %s18, 0
      %p101 = por %p99, %p100
      %p102 = scmp.ne.s32.totalorder %s94, %s96
      %p103 = scmp.eq.s32.totalorder %s23, 1
      %p104 = por %p102, %p103
      %p105 = scmp.ne.s32.totalorder %s96, %s97
      %p106 = scmp.eq.s32.totalorder %s23, 0
      %p107 = por %p105, %p106
      %p108 = scmp.ne.s32.totalorder %s96, %s97
      %p109 = scmp.eq.s32.totalorder %s24, 1
      %p110 = por %p108, %p109
      %p112 = scmp.ne.s32.totalorder %s97, %s111
      %p113 = scmp.eq.s32.totalorder %s24, 0
      %p114 = por %p112, %p113
      %s116 = sadd.s32 %s115, 1
      %p119 = scmp.eq.s32.totalorder %s18, 1
      %p120 = scmp.ne.s32.totalorder %s115, %s117
      %p121 = scmp.eq.s32.totalorder %s18, 0
      %p122 = por %p120, %p121
      %p123 = scmp.ne.s32.totalorder %s115, %s117
      %p124 = scmp.eq.s32.totalorder %s23, 1
      %p125 = por %p123, %p124
      %p126 = scmp.ne.s32.totalorder %s117, %s118
      %p127 = scmp.eq.s32.totalorder %s23, 0
      %p128 = por %p126, %p127
      %p129 = scmp.ne.s32.totalorder %s117, %s118
      %p130 = scmp.eq.s32.totalorder %s24, 1
      %p131 = por %p129, %p130
      %p133 = scmp.ne.s32.totalorder %s118, %s132
      %p134 = scmp.eq.s32.totalorder %s24, 0
      %p135 = por %p133, %p134
      %s136 = ssub.s32 %s18, %s25
      %p137 = scmp.eq.s32.totalorder %s136, 0
      %s139 = sadd.s32 %s138, 1
      %s140 = scalar_select %p137, %s138, %s139
      %p143 = pneg %p137
      %p144 = scmp.eq.s32.totalorder %s18, 1
      %p145 = por %p143, %p144
      %p146 = scmp.ne.s32.totalorder %s138, %s141
      %p147 = scmp.eq.s32.totalorder %s18, 0
      %p148 = por %p146, %p147
      %p149 = scmp.ne.s32.totalorder %s138, %s141
      %p150 = scmp.eq.s32.totalorder %s23, 1
      %p151 = por %p149, %p150
      %p152 = scmp.ne.s32.totalorder %s141, %s142
      %p153 = scmp.eq.s32.totalorder %s23, 0
      %p154 = por %p152, %p153
      %p155 = scmp.ne.s32.totalorder %s141, %s142
      %p156 = scmp.eq.s32.totalorder %s24, 1
      %p157 = por %p155, %p156
      %p159 = scmp.ne.s32.totalorder %s142, %s158
      %p160 = scmp.eq.s32.totalorder %s24, 0
      %p161 = por %p159, %p160
      %p162 = scmp.le.s32.totalorder 1, %s18
      %p163 = scmp.lt.s32.totalorder %s18, 3
      %p164 = pnand %p162, %p163
      %p165 = pneg %p164
      // Predicated region
      $region9: #{tpu_custom_call.1} parent=5 // pred_check
        _
      $region10: #{tpu_custom_call.1} parent=5 // pred_check_branch
        %167 = sbr.rel (%p164) target = $region12
      $region11: #{tpu_custom_call.1} parent=5 // pred_region
        %s168 = ssub.s32 %s18, 1
        // Predicated region
        $region13: #{tpu_custom_call.1} parent=11 // pred_check
          %p169 = pneg %p65
        $region14: #{tpu_custom_call.1} parent=11 // pred_check_branch
          %171 = sbr.rel (%p169) target = $region16
        $region15: #{tpu_custom_call.1} parent=11 // pred_region
          %s173 = ssub.s32 1024, 1024
          %174 = vsyncadd [#allocation6], %s173
          %s175 = sshll.u32 [#allocation5], 4
          %s176 = int_to_ptr.vmem [resolvable:$true] %s175
          %181 = dma.hbm_to_vmem [thread:$0]  %s1, 1024, %s176, [#allocation6], 64, 64, 4
        $region16: #{tpu_custom_call.1} parent=11 // pred_fallthru
          _
        // Predicated region
        $region17: #{tpu_custom_call.1} parent=11 // pred_check
          %p182 = pneg %p86
        $region18: #{tpu_custom_call.1} parent=11 // pred_check_branch
          %184 = sbr.rel (%p182) target = $region20
        $region19: #{tpu_custom_call.1} parent=11 // pred_region
          _
        $region20: #{tpu_custom_call.1} parent=11 // pred_fallthru
          _
        // Predicated region
        $region21: #{tpu_custom_call.1} parent=11 // pred_check
          %p185 = pneg %p107
        $region22: #{tpu_custom_call.1} parent=11 // pred_check_branch
          %187 = sbr.rel (%p185) target = $region24
        $region23: #{tpu_custom_call.1} parent=11 // pred_region
          %s189 = ssub.s32 1024, 1024
          %190 = vsyncadd [#allocation6], %s189
          %s191 = sshll.u32 [#allocation7], 4
          %s192 = int_to_ptr.vmem [resolvable:$true] %s191
          %197 = dma.hbm_to_vmem [thread:$0]  %s3, 1024, %s192, [#allocation6], 64, 64, 4
        $region24: #{tpu_custom_call.1} parent=11 // pred_fallthru
          _
        // Predicated region
        $region25: #{tpu_custom_call.1} parent=11 // pred_check
          %p198 = pneg %p128
        $region26: #{tpu_custom_call.1} parent=11 // pred_check_branch
          %200 = sbr.rel (%p198) target = $region28
        $region27: #{tpu_custom_call.1} parent=11 // pred_region
          _
        $region28: #{tpu_custom_call.1} parent=11 // pred_fallthru
          _
      $region12: #{tpu_custom_call.1} parent=5 // pred_fallthru
        _
      %p201 = scmp.lt.s32.totalorder %s18, 2
      // Predicated region
      $region29: #{tpu_custom_call.1} parent=5 // pred_check
        %p202 = pneg %p201
      $region30: #{tpu_custom_call.1} parent=5 // pred_check_branch
        %204 = sbr.rel (%p202) target = $region32
      $region31: #{tpu_custom_call.1} parent=5 // pred_region
        // Predicated region
        $region33: #{tpu_custom_call.1} parent=31 // pred_check
          %p205 = pneg %p38
        $region34: #{tpu_custom_call.1} parent=31 // pred_check_branch
          %207 = sbr.rel (%p205) target = $region36
        $region35: #{tpu_custom_call.1} parent=31 // pred_region
          %s208 = sand.u32 %s28, 1
          %s209 = scalar_lea.sflag [#allocation3], %s208
          %s210 = sand.u32 %s28, 1
          %s211 = smul.addr %s210, 4
          %s212 = scalar_lea.vmem [#allocation2], %s211
          %s214 = ssub.s32 64, 64
          %215 = vsyncadd %s209, %s214
          %s216 = smul.addr %s18, 64
          %s217 = scalar_lea.hbm %s0, %s216
          %s219 = sshll.u32 %s212, 4
          %s220 = int_to_ptr.vmem [resolvable:$true] %s219
          %222 = dma.hbm_to_vmem [thread:$0]  %s217, 64, %s220, %s209
        $region36: #{tpu_custom_call.1} parent=31 // pred_fallthru
          _
      $region32: #{tpu_custom_call.1} parent=5 // pred_fallthru
        _
      %p223 = scmp.le.s32.totalorder 1, %s18
      %p224 = scmp.lt.s32.totalorder %s18, 3
      %p225 = pnand %p223, %p224
      %p226 = pneg %p225
      // Predicated region
      $region37: #{tpu_custom_call.1} parent=5 // pred_check
        _
      $region38: #{tpu_custom_call.1} parent=5 // pred_check_branch
        %228 = sbr.rel (%p225) target = $region40
      $region39: #{tpu_custom_call.1} parent=5 // pred_region
        %s229 = ssub.s32 %s18, 1
        %s230 = sand.u32 %s31, 1
        %s231 = scalar_lea.sflag [#allocation3], %s230
        %s232 = sand.u32 %s31, 1
        %s233 = smul.addr %s232, 4
        %s234 = scalar_lea.vmem [#allocation2], %s233
        // Predicated region
        $region41: #{tpu_custom_call.1} parent=39 // pred_check
          %p235 = pneg %p44
        $region42: #{tpu_custom_call.1} parent=39 // pred_check_branch
          %237 = sbr.rel (%p235) target = $region44
        $region43: #{tpu_custom_call.1} parent=39 // pred_region
          %238 = dma.done %s231, 64
        $region44: #{tpu_custom_call.1} parent=39 // pred_fallthru
          _
        // Predicated region
        $region45: #{tpu_custom_call.1} parent=39 // pred_check
          %p239 = pneg %p65
        $region46: #{tpu_custom_call.1} parent=39 // pred_check_branch
          %241 = sbr.rel (%p239) target = $region48
        $region47: #{tpu_custom_call.1} parent=39 // pred_region
          %242 = dma.done [#allocation6], 1024
        $region48: #{tpu_custom_call.1} parent=39 // pred_fallthru
          _
        // Predicated region
        $region49: #{tpu_custom_call.1} parent=39 // pred_check
          %p243 = pneg %p107
        $region50: #{tpu_custom_call.1} parent=39 // pred_check_branch
          %245 = sbr.rel (%p243) target = $region52
        $region51: #{tpu_custom_call.1} parent=39 // pred_region
          %246 = dma.done [#allocation6], 1024
        $region52: #{tpu_custom_call.1} parent=39 // pred_fallthru
          _
        %s247 = sand.u32 %s31, 1
        %s248 = scalar_lea.sflag [#allocation3], %s247
        %s249 = sand.u32 %s31, 1
        %s250 = smul.addr %s249, 4
        %s251 = scalar_lea.vmem [#allocation2], %s250
        %p252 = pneg %p44
        %p253 = pneg %p41
        %p254 = pneg %p65
        %p255 = pneg %p62
        %p256 = pneg %p86
        %p257 = pneg %p83
        %p258 = pneg %p107
        %p259 = pneg %p104
        %p260 = pneg %p128
        %p261 = pneg %p125
        %p262 = pneg %p154
        %p263 = pneg %p151
        %s264 = sand.u32 %s141, 1
        %s265 = scalar_lea.sflag [#allocation4], %s264
        %s266 = sand.u32 %s141, 1
        %s267 = smul.addr %s266, 8
        %s268 = scalar_lea.vmem [#allocation8], %s267
        %v270 = vld [vmem:[%s234] sm:$0xf]
        %v271 = vld [vmem:[#allocation5] sm:$0xf]
        %v272 = vld [vmem:[#allocation5 + $0x4] sm:$0xf]
        %v273 = vld [vmem:[#allocation5 + $0x8] sm:$0xf]
        %v274 = vld [vmem:[#allocation5 + $0xc] sm:$0xf]
        %v275 = vld [vmem:[#allocation5 + $0x10] sm:$0xf]
        %v276 = vld [vmem:[#allocation5 + $0x14] sm:$0xf]
        %v277 = vld [vmem:[#allocation5 + $0x18] sm:$0xf]
        %v278 = vld [vmem:[#allocation5 + $0x1c] sm:$0xf]
        %v279 = vld [vmem:[#allocation5 + $0x20] sm:$0xf]
        %v280 = vld [vmem:[#allocation5 + $0x24] sm:$0xf]
        %v281 = vld [vmem:[#allocation5 + $0x28] sm:$0xf]
        %v282 = vld [vmem:[#allocation5 + $0x2c] sm:$0xf]
        %v283 = vld [vmem:[#allocation5 + $0x30] sm:$0xf]
        %v284 = vld [vmem:[#allocation5 + $0x34] sm:$0xf]
        %v285 = vld [vmem:[#allocation5 + $0x38] sm:$0xf]
        %v286 = vld [vmem:[#allocation5 + $0x3c] sm:$0xf]
        %v287 = vld [vmem:[%s2] sm:$0x1]
        %v289 = vlaneseq
        %v290 = vshrl.u32 %v289, 7
        %v291 = vsub.s32 0, %v290
        %v292 = vrot.slane %v287, %v291
        %v310 = vunpack.c.l.b16 %v271
        %v311 = vunpack.c.l.b16 %v272
        %v312 = vunpack.c.l.b16 %v273
        %v313 = vunpack.c.l.b16 %v274
        %v314 = vunpack.c.l.b16 %v275
        %v315 = vunpack.c.l.b16 %v276
        %v316 = vunpack.c.l.b16 %v277
        %v317 = vunpack.c.l.b16 %v278
        %v318 = vunpack.c.l.b16 %v279
        %v319 = vunpack.c.l.b16 %v280
        %v320 = vunpack.c.l.b16 %v281
        %v321 = vunpack.c.l.b16 %v282
        %v322 = vunpack.c.l.b16 %v283
        %v323 = vunpack.c.l.b16 %v284
        %v324 = vunpack.c.l.b16 %v285
        %v325 = vunpack.c.l.b16 %v286
        %v326 = vpack.c.b16 %v311, %v310
        %v327 = vpack.c.b16 %v313, %v312
        %v328 = vpack.c.b16 %v315, %v314
        %v329 = vpack.c.b16 %v317, %v316
        %v330 = vpack.c.b16 %v319, %v318
        %v331 = vpack.c.b16 %v321, %v320
        %v332 = vpack.c.b16 %v323, %v322
        %v333 = vpack.c.b16 %v325, %v324
        %342 = vmatprep.subr.bf16.mxu0 0
        %343 = vmatpush1.bf16.msra.mxu0 %v326
        %344 = vmatprep.subr.bf16.mxu0 0
        %345 = vmatpush1.bf16.msra.mxu0 %v327
        %346 = vmatprep.subr.bf16.mxu0 0
        %347 = vmatpush1.bf16.msra.mxu0 %v328
        %348 = vmatprep.subr.bf16.mxu0 0
        %349 = vmatpush1.bf16.msra.mxu0 %v329
        %350 = vmatprep.subr.bf16.mxu0 0
        %351 = vmatpush1.bf16.msra.mxu0 %v330
        %352 = vmatprep.subr.bf16.mxu0 0
        %353 = vmatpush1.bf16.msra.mxu0 %v331
        %354 = vmatprep.subr.bf16.mxu0 0
        %355 = vmatpush1.bf16.msra.mxu0 %v332
        %356 = vmatprep.subr.bf16.mxu0 0
        %357 = vmatpush1.bf16.msra.mxu0 %v333
        %358 = vmatprep.subr.bf16.mxu0 0
        %359 = vmatpush1.bf16.msra.mxu0 0
        %360 = vmatprep.subr.bf16.mxu0 0
        %361 = vmatpush1.bf16.msra.mxu0 0
        %362 = vmatprep.subr.bf16.mxu0 0
        %363 = vmatpush1.bf16.msra.mxu0 0
        %364 = vmatprep.subr.bf16.mxu0 0
        %365 = vmatpush1.bf16.msra.mxu0 0
        %366 = vmatprep.subr.bf16.mxu0 0
        %367 = vmatpush1.bf16.msra.mxu0 0
        %368 = vmatprep.subr.bf16.mxu0 0
        %369 = vmatpush1.bf16.msra.mxu0 0
        %370 = vmatprep.subr.bf16.mxu0 0
        %371 = vmatpush1.bf16.msra.mxu0 0
        %372 = vmatprep.subr.bf16.mxu0 0
        %373 = vmatpush1.bf16.msra.mxu0 0
        %374 = vmatprep.mubr.bf16.mxu0 0
        %375 = vmatmul.mubr.bf16.gmra.mrb[0].mxu0 %v270
        %v376 = vpop.f32.mrb[0].mxu0
        %v377 = vadd.f32 %v292, %v376
        %v378 = vpop.f32.mrb[0].mxu0
        %v379 = vpop.f32.mrb[0].mxu0
        %v380 = vpop.f32.mrb[0].mxu0
        %381 = vdwg.mxu0
        %v382 = vmax.f32 %v377, 0.0
        %v383 = vpack.c.bf16 %v382, %v382
        %v384 = vld [vmem:[#allocation7] sm:$0xf]
        %v385 = vld [vmem:[#allocation7 + $0x4] sm:$0xf]
        %v386 = vld [vmem:[#allocation7 + $0x8] sm:$0xf]
        %v387 = vld [vmem:[#allocation7 + $0xc] sm:$0xf]
        %v388 = vld [vmem:[#allocation7 + $0x10] sm:$0xf]
        %v389 = vld [vmem:[#allocation7 + $0x14] sm:$0xf]
        %v390 = vld [vmem:[#allocation7 + $0x18] sm:$0xf]
        %v391 = vld [vmem:[#allocation7 + $0x1c] sm:$0xf]
        %v392 = vld [vmem:[#allocation7 + $0x20] sm:$0xf]
        %v393 = vld [vmem:[#allocation7 + $0x24] sm:$0xf]
        %v394 = vld [vmem:[#allocation7 + $0x28] sm:$0xf]
        %v395 = vld [vmem:[#allocation7 + $0x2c] sm:$0xf]
        %v396 = vld [vmem:[#allocation7 + $0x30] sm:$0xf]
        %v397 = vld [vmem:[#allocation7 + $0x34] sm:$0xf]
        %v398 = vld [vmem:[#allocation7 + $0x38] sm:$0xf]
        %v399 = vld [vmem:[#allocation7 + $0x3c] sm:$0xf]
        %v400 = vld [vmem:[%s4] sm:$0x1]
        %v402 = vlaneseq
        %v403 = vshrl.u32 %v402, 7
        %v404 = vsub.s32 0, %v403
        %v405 = vrot.slane %v400, %v404
        %v423 = vunpack.c.l.b16 %v384
        %v424 = vunpack.c.l.b16 %v385
        %v425 = vunpack.c.l.b16 %v386
        %v426 = vunpack.c.l.b16 %v387
        %v427 = vunpack.c.l.b16 %v388
        %v428 = vunpack.c.l.b16 %v389
        %v429 = vunpack.c.l.b16 %v390
        %v430 = vunpack.c.l.b16 %v391
        %v431 = vunpack.c.l.b16 %v392
        %v432 = vunpack.c.l.b16 %v393
        %v433 = vunpack.c.l.b16 %v394
        %v434 = vunpack.c.l.b16 %v395
        %v435 = vunpack.c.l.b16 %v396
        %v436 = vunpack.c.l.b16 %v397
        %v437 = vunpack.c.l.b16 %v398
        %v438 = vunpack.c.l.b16 %v399
        %v439 = vpack.c.b16 %v424, %v423
        %v440 = vpack.c.b16 %v426, %v425
        %v441 = vpack.c.b16 %v428, %v427
        %v442 = vpack.c.b16 %v430, %v429
        %v443 = vpack.c.b16 %v432, %v431
        %v444 = vpack.c.b16 %v434, %v433
        %v445 = vpack.c.b16 %v436, %v435
        %v446 = vpack.c.b16 %v438, %v437
        %455 = vmatprep.subr.bf16.mxu0 0
        %456 = vmatpush1.bf16.msra.mxu0 %v439
        %457 = vmatprep.subr.bf16.mxu0 0
        %458 = vmatpush1.bf16.msra.mxu0 %v440
        %459 = vmatprep.subr.bf16.mxu0 0
        %460 = vmatpush1.bf16.msra.mxu0 %v441
        %461 = vmatprep.subr.bf16.mxu0 0
        %462 = vmatpush1.bf16.msra.mxu0 %v442
        %463 = vmatprep.subr.bf16.mxu0 0
        %464 = vmatpush1.bf16.msra.mxu0 %v443
        %465 = vmatprep.subr.bf16.mxu0 0
        %466 = vmatpush1.bf16.msra.mxu0 %v444
        %467 = vmatprep.subr.bf16.mxu0 0
        %468 = vmatpush1.bf16.msra.mxu0 %v445
        %469 = vmatprep.subr.bf16.mxu0 0
        %470 = vmatpush1.bf16.msra.mxu0 %v446
        %471 = vmatprep.subr.bf16.mxu0 0
        %472 = vmatpush1.bf16.msra.mxu0 0
        %473 = vmatprep.subr.bf16.mxu0 0
        %474 = vmatpush1.bf16.msra.mxu0 0
        %475 = vmatprep.subr.bf16.mxu0 0
        %476 = vmatpush1.bf16.msra.mxu0 0
        %477 = vmatprep.subr.bf16.mxu0 0
        %478 = vmatpush1.bf16.msra.mxu0 0
        %479 = vmatprep.subr.bf16.mxu0 0
        %480 = vmatpush1.bf16.msra.mxu0 0
        %481 = vmatprep.subr.bf16.mxu0 0
        %482 = vmatpush1.bf16.msra.mxu0 0
        %483 = vmatprep.subr.bf16.mxu0 0
        %484 = vmatpush1.bf16.msra.mxu0 0
        %485 = vmatprep.subr.bf16.mxu0 0
        %486 = vmatpush1.bf16.msra.mxu0 0
        %487 = vmatprep.mubr.bf16.mxu0 0
        %488 = vmatmul.mubr.bf16.gmra.mrb[0].mxu0 %v383
        %v489 = vpop.f32.mrb[0].mxu0
        %v490 = vadd.f32 %v405, %v489
        %v491 = vpop.f32.mrb[0].mxu0
        %v492 = vpop.f32.mrb[0].mxu0
        %v493 = vpop.f32.mrb[0].mxu0
        %494 = vdwg.mxu0
        %495 = vmax.xlane.f32.xlu0 %v490
        %v496 = vpop.xlane.xlu0 %495
        %v497 = vsub.f32 %v490, %v496
        %v498 = vmul.f32 %v497, 1.442695
        %v499 = vpow.pop %v498
        %500 = vadd.xlane.f32.xlu0 %v499
        %v501 = vpop.xlane.xlu0 %500
        %v502 = vrcp.pop %v501
        %v503 = vmul.f32 %v499, %v502
        %504 = vst [vmem:[%s268] sm:$0xff] %v503
        %s505 = sand.u32 %s141, 1
        %s506 = scalar_lea.sflag [#allocation4], %s505
        %s507 = sand.u32 %s141, 1
        %s508 = smul.addr %s507, 8
        %s509 = scalar_lea.vmem [#allocation8], %s508
        // Predicated region
        $region53: #{tpu_custom_call.1} parent=39 // pred_check
          %p510 = pneg %p151
        $region54: #{tpu_custom_call.1} parent=39 // pred_check_branch
          %512 = sbr.rel (%p510) target = $region56
        $region55: #{tpu_custom_call.1} parent=39 // pred_region
          %s514 = ssub.s32 128, 128
          %515 = vsyncadd %s506, %s514
          %s516 = smul.addr %s23, 128
          %s517 = scalar_lea.hbm %s5, %s516
          %s519 = sshll.u32 %s509, 4
          %s520 = int_to_ptr.vmem [resolvable:$true] %s519
          %522 = dma.vmem_to_hbm [thread:$0]  %s520, 128, %s517, %s506
        $region56: #{tpu_custom_call.1} parent=39 // pred_fallthru
          _
      $region40: #{tpu_custom_call.1} parent=5 // pred_fallthru
        _
      %p523 = scmp.le.s32.totalorder 2, %s18
      // Predicated region
      $region57: #{tpu_custom_call.1} parent=5 // pred_check
        %p524 = pneg %p523
      $region58: #{tpu_custom_call.1} parent=5 // pred_check_branch
        %526 = sbr.rel (%p524) target = $region60
      $region59: #{tpu_custom_call.1} parent=5 // pred_region
        %s527 = ssub.s32 %s18, 2
        // Predicated region
        $region61: #{tpu_custom_call.1} parent=59 // pred_check
          %p528 = pneg %p157
        $region62: #{tpu_custom_call.1} parent=59 // pred_check_branch
          %530 = sbr.rel (%p528) target = $region64
        $region63: #{tpu_custom_call.1} parent=59 // pred_region
          %s531 = sand.u32 %s142, 1
          %s532 = scalar_lea.sflag [#allocation4], %s531
          %s533 = sand.u32 %s142, 1
          %s534 = smul.addr %s533, 8
          %s535 = scalar_lea.vmem [#allocation8], %s534
          %536 = dma.done %s532, 128
        $region64: #{tpu_custom_call.1} parent=59 // pred_fallthru
          _
      $region60: #{tpu_custom_call.1} parent=5 // pred_fallthru
        _
    $region6: #{tpu_custom_call.1} parent=1 // loop_footer
      %s22 = sadd.s32 1, %s18
    $region7: #{tpu_custom_call.1} parent=1 // loop_footer_branch
      %17 = sbr.rel target = $region3
    $region8: #{tpu_custom_call.1} parent=1 // loop_exit
      _
    %537 = vsyncpa [#allocation3], 1
    %s538 = scalar_lea.sflag [#allocation3], 1
    %539 = vsyncpa %s538, 1
    %540 = vsyncpa [#allocation6], 1
    %541 = vsyncpa [#allocation4], 1
    %s542 = scalar_lea.sflag [#allocation4], 1
    %543 = vsyncpa %s542, 1

// kernel: tpu_custom_call.1
$region0: #{tpu_custom_call.1}
  #allocation0 [shape = 'u32[]', space=smem, size = 0x4, offset = 0x4, fixed_abs, tag = 'smem constant byte address 0x4 - core index']
  #allocation1 [shape = 'u32[144,128]{1,0:T(1,128)}', space=vmem, size = 0x12000, scoped, tag = 'internal scratch']
  %s0 = inlined_call_operand.hbm [shape: bf16[16,128], index: 0, kind: input, shape index: {}]
  %s1 = inlined_call_operand.hbm [shape: bf16[128,128], index: 1, kind: input, shape index: {}]
  %s2 = inlined_call_operand.vmem [shape: f32[1,128], index: 2, kind: input, shape index: {}]
  %s3 = inlined_call_operand.hbm [shape: bf16[128,128], index: 3, kind: input, shape index: {}]
  %s4 = inlined_call_operand.vmem [shape: f32[1,128], index: 4, kind: input, shape index: {}]
  %s5 = inlined_call_operand.hbm [shape: f32[16,128], index: 5, kind: output, shape index: {}]
  %s6 = sld [smem:[#allocation0]]
  $region65: #{tpu_custom_call.1} parent=0
    _
  %s8 = ssub.s32 1, %s6
  %s9 = scalar_select 0, %s8, %s6
  $region1: #{tpu_custom_call.1} parent=0
    #allocation2 [shape = 'u8[4096]{0}', space=vmem, size = 0x1000, scoped, tag = 'input window, operand 0']
    #allocation3 [shape = 's32[2]{0}', space=sflag, size = 0x8, scoped, tag = 'scoped memory for tpu_custom_call.1']
    #allocation4 [shape = 's32[2]{0}', space=sflag, size = 0x8, scoped, tag = 'scoped memory for tpu_custom_call.1']
    #allocation5 [shape = 'u8[32768]{0}', space=vmem, size = 0x8000, scoped, tag = 'input window, operand 1, single buffered']
    #allocation6 [shape = 's32[1]{0}', space=sflag, size = 0x4, scoped, tag = 'scoped memory for tpu_custom_call.1']
    #allocation7 [shape = 'u8[32768]{0}', space=vmem, size = 0x8000, scoped, tag = 'input window, operand 3, single buffered']
    #allocation8 [shape = 'u8[8192]{0}', space=vmem, size = 0x2000, scoped, tag = 'output window, operand 0']
    %10 = vsyncpa [#allocation3], 0
    %s11 = scalar_lea.sflag [#allocation3], 1
    %12 = vsyncpa %s11, 0
    %13 = vsyncpa [#allocation6], 0
    %14 = vsyncpa [#allocation4], 0
    %s15 = scalar_lea.sflag [#allocation4], 1
    %16 = vsyncpa %s15, 0
    loop: start=0, step=1, limit=4
    $region2: #{tpu_custom_call.1} parent=1 // loop_pre_header
      _
    $region3: #{tpu_custom_call.1} parent=1 // loop_header
      %s18 = sphi 0, %s22
      %p19 = scmp.ge.s32.totalorder %s18, 4
      %s28 = sphi 0, %s30
      %s31 = sphi 0, %s28
      %s32 = sphi 0, %s31
      %s48 = sphi 0, %s32
      %s52 = sphi 0, %s52
      %s54 = sphi 0, %s52
      %s55 = sphi 0, %s54
      %s69 = sphi 0, %s55
      %s73 = sphi 0, %s73
      %s75 = sphi 0, %s73
      %s76 = sphi 0, %s75
      %s90 = sphi 0, %s76
      %s94 = sphi 0, %s94
      %s96 = sphi 0, %s94
      %s97 = sphi 0, %s96
      %s111 = sphi 0, %s97
      %s115 = sphi 0, %s115
      %s117 = sphi 0, %s115
      %s118 = sphi 0, %s117
      %s132 = sphi 0, %s118
      %s138 = sphi 0, %s140
      %s141 = sphi 0, %s138
      %s142 = sphi 0, %s141
      %s158 = sphi 0, %s142
    $region4: #{tpu_custom_call.1} parent=1 // loop_header_branch
      %21 = sbr.rel (%p19) target = $region8
    $region5: #{tpu_custom_call.1} parent=1 // loop_body
      %s23 = ssub.s32 %s18, 1
      %s24 = ssub.s32 %s18, 2
      %s25 = sadd.s32 %s18, 1
      %s26 = ssub.s32 %s18, %s25
      %p27 = scmp.eq.s32.totalorder %s26, 0
      %s29 = sadd.s32 %s28, 1
      %s30 = scalar_select %p27, %s28, %s29
      %p33 = pneg %p27
      %p34 = scmp.eq.s32.totalorder %s18, 1
      %p35 = por %p33, %p34
      %p36 = scmp.ne.s32.totalorder %s28, %s31
      %p37 = scmp.eq.s32.totalorder %s18, 0
      %p38 = por %p36, %p37
      %p39 = scmp.ne.s32.totalorder %s28, %s31
      %p40 = scmp.eq.s32.totalorder %s23, 1
      %p41 = por %p39, %p40
      %p42 = scmp.ne.s32.totalorder %s31, %s32
      %p43 = scmp.eq.s32.totalorder %s23, 0
      %p44 = por %p42, %p43
      %p45 = scmp.ne.s32.totalorder %s31, %s32
      %p46 = scmp.eq.s32.totalorder %s24, 1
      %p47 = por %p45, %p46
      %p49 = scmp.ne.s32.totalorder %s32, %s48
      %p50 = scmp.eq.s32.totalorder %s24, 0
      %p51 = por %p49, %p50
      %s53 = sadd.s32 %s52, 1
      %p56 = scmp.eq.s32.totalorder %s18, 1
      %p57 = scmp.ne.s32.totalorder %s52, %s54
      %p58 = scmp.eq.s32.totalorder %s18, 0
      %p59 = por %p57, %p58
      %p60 = scmp.ne.s32.totalorder %s52, %s54
      %p61 = scmp.eq.s32.totalorder %s23, 1
      %p62 = por %p60, %p61
      %p63 = scmp.ne.s32.totalorder %s54, %s55
      %p64 = scmp.eq.s32.totalorder %s23, 0
      %p65 = por %p63, %p64
      %p66 = scmp.ne.s32.totalorder %s54, %s55
      %p67 = scmp.eq.s32.totalorder %s24, 1
      %p68 = por %p66, %p67
      %p70 = scmp.ne.s32.totalorder %s55, %s69
      %p71 = scmp.eq.s32.totalorder %s24, 0
      %p72 = por %p70, %p71
      %s74 = sadd.s32 %s73, 1
      %p77 = scmp.eq.s32.totalorder %s18, 1
      %p78 = scmp.ne.s32.totalorder %s73, %s75
      %p79 = scmp.eq.s32.totalorder %s18, 0
      %p80 = por %p78, %p79
      %p81 = scmp.ne.s32.totalorder %s73, %s75
      %p82 = scmp.eq.s32.totalorder %s23, 1
      %p83 = por %p81, %p82
      %p84 = scmp.ne.s32.totalorder %s75, %s76
      %p85 = scmp.eq.s32.totalorder %s23, 0
      %p86 = por %p84, %p85
      %p87 = scmp.ne.s32.totalorder %s75, %s76
      %p88 = scmp.eq.s32.totalorder %s24, 1
      %p89 = por %p87, %p88
      %p91 = scmp.ne.s32.totalorder %s76, %s90
      %p92 = scmp.eq.s32.totalorder %s24, 0
      %p93 = por %p91, %p92
      %s95 = sadd.s32 %s94, 1
      %p98 = scmp.eq.s32.totalorder %s18, 1
      %p99 = scmp.ne.s32.totalorder %s94, %s96
      %p100 = scmp.eq.s32.totalorder %s18, 0
      %p101 = por %p99, %p100
      %p102 = scmp.ne.s32.totalorder %s94, %s96
      %p103 = scmp.eq.s32.totalorder %s23, 1
      %p104 = por %p102, %p103
      %p105 = scmp.ne.s32.totalorder %s96, %s97
      %p106 = scmp.eq.s32.totalorder %s23, 0
      %p107 = por %p105, %p106
      %p108 = scmp.ne.s32.totalorder %s96, %s97
      %p109 = scmp.eq.s32.totalorder %s24, 1
      %p110 = por %p108, %p109
      %p112 = scmp.ne.s32.totalorder %s97, %s111
      %p113 = scmp.eq.s32.totalorder %s24, 0
      %p114 = por %p112, %p113
      %s116 = sadd.s32 %s115, 1
      %p119 = scmp.eq.s32.totalorder %s18, 1
      %p120 = scmp.ne.s32.totalorder %s115, %s117
      %p121 = scmp.eq.s32.totalorder %s18, 0
      %p122 = por %p120, %p121
      %p123 = scmp.ne.s32.totalorder %s115, %s117
      %p124 = scmp.eq.s32.totalorder %s23, 1
      %p125 = por %p123, %p124
      %p126 = scmp.ne.s32.totalorder %s117, %s118
      %p127 = scmp.eq.s32.totalorder %s23, 0
      %p128 = por %p126, %p127
      %p129 = scmp.ne.s32.totalorder %s117, %s118
      %p130 = scmp.eq.s32.totalorder %s24, 1
      %p131 = por %p129, %p130
      %p133 = scmp.ne.s32.totalorder %s118, %s132
      %p134 = scmp.eq.s32.totalorder %s24, 0
      %p135 = por %p133, %p134
      %s136 = ssub.s32 %s18, %s25
      %p137 = scmp.eq.s32.totalorder %s136, 0
      %s139 = sadd.s32 %s138, 1
      %s140 = scalar_select %p137, %s138, %s139
      %p143 = pneg %p137
      %p144 = scmp.eq.s32.totalorder %s18, 1
      %p145 = por %p143, %p144
      %p146 = scmp.ne.s32.totalorder %s138, %s141
      %p147 = scmp.eq.s32.totalorder %s18, 0
      %p148 = por %p146, %p147
      %p149 = scmp.ne.s32.totalorder %s138, %s141
      %p150 = scmp.eq.s32.totalorder %s23, 1
      %p151 = por %p149, %p150
      %p152 = scmp.ne.s32.totalorder %s141, %s142
      %p153 = scmp.eq.s32.totalorder %s23, 0
      %p154 = por %p152, %p153
      %p155 = scmp.ne.s32.totalorder %s141, %s142
      %p156 = scmp.eq.s32.totalorder %s24, 1
      %p157 = por %p155, %p156
      %p159 = scmp.ne.s32.totalorder %s142, %s158
      %p160 = scmp.eq.s32.totalorder %s24, 0
      %p161 = por %p159, %p160
      %p162 = scmp.le.s32.totalorder 1, %s18
      %p163 = scmp.lt.s32.totalorder %s18, 3
      %p164 = pnand %p162, %p163
      %p165 = pneg %p164
      // Predicated region
      $region9: #{tpu_custom_call.1} parent=5 // pred_check
        _
      $region10: #{tpu_custom_call.1} parent=5 // pred_check_branch
        %167 = sbr.rel (%p164) target = $region12
      $region11: #{tpu_custom_call.1} parent=5 // pred_region
        %s168 = ssub.s32 %s18, 1
        // Predicated region
        $region13: #{tpu_custom_call.1} parent=11 // pred_check
          %p169 = pneg %p65
        $region14: #{tpu_custom_call.1} parent=11 // pred_check_branch
          %171 = sbr.rel (%p169) target = $region16
        $region15: #{tpu_custom_call.1} parent=11 // pred_region
          %s173 = ssub.s32 1024, 1024
          %174 = vsyncadd [#allocation6], %s173
          %s175 = sshll.u32 [#allocation5], 4
          %s176 = int_to_ptr.vmem [resolvable:$true] %s175
          %181 = dma.hbm_to_vmem [thread:$0]  %s1, 1024, %s176, [#allocation6], 64, 64, 4
        $region16: #{tpu_custom_call.1} parent=11 // pred_fallthru
          _
        // Predicated region
        $region17: #{tpu_custom_call.1} parent=11 // pred_check
          %p182 = pneg %p86
        $region18: #{tpu_custom_call.1} parent=11 // pred_check_branch
          %184 = sbr.rel (%p182) target = $region20
        $region19: #{tpu_custom_call.1} parent=11 // pred_region
          _
        $region20: #{tpu_custom_call.1} parent=11 // pred_fallthru
          _
        // Predicated region
        $region21: #{tpu_custom_call.1} parent=11 // pred_check
          %p185 = pneg %p107
        $region22: #{tpu_custom_call.1} parent=11 // pred_check_branch
          %187 = sbr.rel (%p185) target = $region24
        $region23: #{tpu_custom_call.1} parent=11 // pred_region
          %s189 = ssub.s32 1024, 1024
          %190 = vsyncadd [#allocation6], %s189
          %s191 = sshll.u32 [#allocation7], 4
          %s192 = int_to_ptr.vmem [resolvable:$true] %s191
          %197 = dma.hbm_to_vmem [thread:$0]  %s3, 1024, %s192, [#allocation6], 64, 64, 4
        $region24: #{tpu_custom_call.1} parent=11 // pred_fallthru
          _
        // Predicated region
        $region25: #{tpu_custom_call.1} parent=11 // pred_check
          %p198 = pneg %p128
        $region26: #{tpu_custom_call.1} parent=11 // pred_check_branch
          %200 = sbr.rel (%p198) target = $region28
        $region27: #{tpu_custom_call.1} parent=11 // pred_region
          _
        $region28: #{tpu_custom_call.1} parent=11 // pred_fallthru
          _
      $region12: #{tpu_custom_call.1} parent=5 // pred_fallthru
        _
      %p201 = scmp.lt.s32.totalorder %s18, 2
      // Predicated region
      $region29: #{tpu_custom_call.1} parent=5 // pred_check
        %p202 = pneg %p201
      $region30: #{tpu_custom_call.1} parent=5 // pred_check_branch
        %204 = sbr.rel (%p202) target = $region32
      $region31: #{tpu_custom_call.1} parent=5 // pred_region
        // Predicated region
        $region33: #{tpu_custom_call.1} parent=31 // pred_check
          %p205 = pneg %p38
        $region34: #{tpu_custom_call.1} parent=31 // pred_check_branch
          %207 = sbr.rel (%p205) target = $region36
        $region35: #{tpu_custom_call.1} parent=31 // pred_region
          %s208 = sand.u32 %s28, 1
          %s209 = scalar_lea.sflag [#allocation3], %s208
          %s210 = sand.u32 %s28, 1
          %s211 = smul.addr %s210, 4
          %s212 = scalar_lea.vmem [#allocation2], %s211
          %s214 = ssub.s32 64, 64
          %215 = vsyncadd %s209, %s214
          %s216 = smul.addr %s18, 64
          %s217 = scalar_lea.hbm %s0, %s216
          %s219 = sshll.u32 %s212, 4
          %s220 = int_to_ptr.vmem [resolvable:$true] %s219
          %222 = dma.hbm_to_vmem [thread:$0]  %s217, 64, %s220, %s209
        $region36: #{tpu_custom_call.1} parent=31 // pred_fallthru
          _
      $region32: #{tpu_custom_call.1} parent=5 // pred_fallthru
        _
      %p223 = scmp.le.s32.totalorder 1, %s18
      %p224 = scmp.lt.s32.totalorder %s18, 3
      %p225 = pnand %p223, %p224
      %p226 = pneg %p225
      // Predicated region
      $region37: #{tpu_custom_call.1} parent=5 // pred_check
        _
      $region38: #{tpu_custom_call.1} parent=5 // pred_check_branch
        %228 = sbr.rel (%p225) target = $region40
      $region39: #{tpu_custom_call.1} parent=5 // pred_region
        %s229 = ssub.s32 %s18, 1
        %s230 = sand.u32 %s31, 1
        %s231 = scalar_lea.sflag [#allocation3], %s230
        %s232 = sand.u32 %s31, 1
        %s233 = smul.addr %s232, 4
        %s234 = scalar_lea.vmem [#allocation2], %s233
        // Predicated region
        $region41: #{tpu_custom_call.1} parent=39 // pred_check
          %p235 = pneg %p44
        $region42: #{tpu_custom_call.1} parent=39 // pred_check_branch
          %237 = sbr.rel (%p235) target = $region44
        $region43: #{tpu_custom_call.1} parent=39 // pred_region
          %238 = dma.done %s231, 64
        $region44: #{tpu_custom_call.1} parent=39 // pred_fallthru
          _
        // Predicated region
        $region45: #{tpu_custom_call.1} parent=39 // pred_check
          %p239 = pneg %p65
        $region46: #{tpu_custom_call.1} parent=39 // pred_check_branch
          %241 = sbr.rel (%p239) target = $region48
        $region47: #{tpu_custom_call.1} parent=39 // pred_region
          %242 = dma.done [#allocation6], 1024
        $region48: #{tpu_custom_call.1} parent=39 // pred_fallthru
          _
        // Predicated region
        $region49: #{tpu_custom_call.1} parent=39 // pred_check
          %p243 = pneg %p107
        $region50: #{tpu_custom_call.1} parent=39 // pred_check_branch
          %245 = sbr.rel (%p243) target = $region52
        $region51: #{tpu_custom_call.1} parent=39 // pred_region
          %246 = dma.done [#allocation6], 1024
        $region52: #{tpu_custom_call.1} parent=39 // pred_fallthru
          _
        %s247 = sand.u32 %s31, 1
        %s248 = scalar_lea.sflag [#allocation3], %s247
        %s249 = sand.u32 %s31, 1
        %s250 = smul.addr %s249, 4
        %s251 = scalar_lea.vmem [#allocation2], %s250
        %p252 = pneg %p44
        %p253 = pneg %p41
        %p254 = pneg %p65
        %p255 = pneg %p62
        %p256 = pneg %p86
        %p257 = pneg %p83
        %p258 = pneg %p107
        %p259 = pneg %p104
        %p260 = pneg %p128
        %p261 = pneg %p125
        %p262 = pneg %p154
        %p263 = pneg %p151
        %s264 = sand.u32 %s141, 1
        %s265 = scalar_lea.sflag [#allocation4], %s264
        %s266 = sand.u32 %s141, 1
        %s267 = smul.addr %s266, 8
        %s268 = scalar_lea.vmem [#allocation8], %s267
        %v270 = vld [vmem:[%s234] sm:$0xf]
        %v271 = vld [vmem:[#allocation5] sm:$0xf]
        %v272 = vld [vmem:[#allocation5 + $0x4] sm:$0xf]
        %v273 = vld [vmem:[#allocation5 + $0x8] sm:$0xf]
        %v274 = vld [vmem:[#allocation5 + $0xc] sm:$0xf]
        %v275 = vld [vmem:[#allocation5 + $0x10] sm:$0xf]
        %v276 = vld [vmem:[#allocation5 + $0x14] sm:$0xf]
        %v277 = vld [vmem:[#allocation5 + $0x18] sm:$0xf]
        %v278 = vld [vmem:[#allocation5 + $0x1c] sm:$0xf]
        %v279 = vld [vmem:[#allocation5 + $0x20] sm:$0xf]
        %v280 = vld [vmem:[#allocation5 + $0x24] sm:$0xf]
        %v281 = vld [vmem:[#allocation5 + $0x28] sm:$0xf]
        %v282 = vld [vmem:[#allocation5 + $0x2c] sm:$0xf]
        %v283 = vld [vmem:[#allocation5 + $0x30] sm:$0xf]
        %v284 = vld [vmem:[#allocation5 + $0x34] sm:$0xf]
        %v285 = vld [vmem:[#allocation5 + $0x38] sm:$0xf]
        %v286 = vld [vmem:[#allocation5 + $0x3c] sm:$0xf]
        %v287 = vld [vmem:[%s2] sm:$0x1]
        %v289 = vlaneseq
        %v290 = vshrl.u32 %v289, 7
        %v291 = vsub.s32 0, %v290
        %v292 = vrot.slane %v287, %v291
        %v310 = vunpack.c.l.b16 %v271
        %v311 = vunpack.c.l.b16 %v272
        %v312 = vunpack.c.l.b16 %v273
        %v313 = vunpack.c.l.b16 %v274
        %v314 = vunpack.c.l.b16 %v275
        %v315 = vunpack.c.l.b16 %v276
        %v316 = vunpack.c.l.b16 %v277
        %v317 = vunpack.c.l.b16 %v278
        %v318 = vunpack.c.l.b16 %v279
        %v319 = vunpack.c.l.b16 %v280
        %v320 = vunpack.c.l.b16 %v281
        %v321 = vunpack.c.l.b16 %v282
        %v322 = vunpack.c.l.b16 %v283
        %v323 = vunpack.c.l.b16 %v284
        %v324 = vunpack.c.l.b16 %v285
        %v325 = vunpack.c.l.b16 %v286
        %v326 = vpack.c.b16 %v311, %v310
        %v327 = vpack.c.b16 %v313, %v312
        %v328 = vpack.c.b16 %v315, %v314
        %v329 = vpack.c.b16 %v317, %v316
        %v330 = vpack.c.b16 %v319, %v318
        %v331 = vpack.c.b16 %v321, %v320
        %v332 = vpack.c.b16 %v323, %v322
        %v333 = vpack.c.b16 %v325, %v324
        %342 = vmatprep.subr.bf16.mxu0 0
        %343 = vmatpush1.bf16.msra.mxu0 %v326
        %344 = vmatprep.subr.bf16.mxu0 0
        %345 = vmatpush1.bf16.msra.mxu0 %v327
        %346 = vmatprep.subr.bf16.mxu0 0
        %347 = vmatpush1.bf16.msra.mxu0 %v328
        %348 = vmatprep.subr.bf16.mxu0 0
        %349 = vmatpush1.bf16.msra.mxu0 %v329
        %350 = vmatprep.subr.bf16.mxu0 0
        %351 = vmatpush1.bf16.msra.mxu0 %v330
        %352 = vmatprep.subr.bf16.mxu0 0
        %353 = vmatpush1.bf16.msra.mxu0 %v331
        %354 = vmatprep.subr.bf16.mxu0 0
        %355 = vmatpush1.bf16.msra.mxu0 %v332
        %356 = vmatprep.subr.bf16.mxu0 0
        %357 = vmatpush1.bf16.msra.mxu0 %v333
        %358 = vmatprep.subr.bf16.mxu0 0
        %359 = vmatpush1.bf16.msra.mxu0 0
        %360 = vmatprep.subr.bf16.mxu0 0
        %361 = vmatpush1.bf16.msra.mxu0 0
        %362 = vmatprep.subr.bf16.mxu0 0
        %363 = vmatpush1.bf16.msra.mxu0 0
        %364 = vmatprep.subr.bf16.mxu0 0
        %365 = vmatpush1.bf16.msra.mxu0 0
        %366 = vmatprep.subr.bf16.mxu0 0
        %367 = vmatpush1.bf16.msra.mxu0 0
        %368 = vmatprep.subr.bf16.mxu0 0
        %369 = vmatpush1.bf16.msra.mxu0 0
        %370 = vmatprep.subr.bf16.mxu0 0
        %371 = vmatpush1.bf16.msra.mxu0 0
        %372 = vmatprep.subr.bf16.mxu0 0
        %373 = vmatpush1.bf16.msra.mxu0 0
        %374 = vmatprep.mubr.bf16.mxu0 0
        %375 = vmatmul.mubr.bf16.gmra.mrb[0].mxu0 %v270
        %v376 = vpop.f32.mrb[0].mxu0
        %v377 = vadd.f32 %v292, %v376
        %v378 = vpop.f32.mrb[0].mxu0
        %v379 = vpop.f32.mrb[0].mxu0
        %v380 = vpop.f32.mrb[0].mxu0
        %381 = vdwg.mxu0
        %v382 = vmax.f32 %v377, 0.0
        %v383 = vpack.c.bf16 %v382, %v382
        %v384 = vld [vmem:[#allocation7] sm:$0xf]
        %v385 = vld [vmem:[#allocation7 + $0x4] sm:$0xf]
        %v386 = vld [vmem:[#allocation7 + $0x8] sm:$0xf]
        %v387 = vld [vmem:[#allocation7 + $0xc] sm:$0xf]
        %v388 = vld [vmem:[#allocation7 + $0x10] sm:$0xf]
        %v389 = vld [vmem:[#allocation7 + $0x14] sm:$0xf]
        %v390 = vld [vmem:[#allocation7 + $0x18] sm:$0xf]
        %v391 = vld [vmem:[#allocation7 + $0x1c] sm:$0xf]
        %v392 = vld [vmem:[#allocation7 + $0x20] sm:$0xf]
        %v393 = vld [vmem:[#allocation7 + $0x24] sm:$0xf]
        %v394 = vld [vmem:[#allocation7 + $0x28] sm:$0xf]
        %v395 = vld [vmem:[#allocation7 + $0x2c] sm:$0xf]
        %v396 = vld [vmem:[#allocation7 + $0x30] sm:$0xf]
        %v397 = vld [vmem:[#allocation7 + $0x34] sm:$0xf]
        %v398 = vld [vmem:[#allocation7 + $0x38] sm:$0xf]
        %v399 = vld [vmem:[#allocation7 + $0x3c] sm:$0xf]
        %v400 = vld [vmem:[%s4] sm:$0x1]
        %v402 = vlaneseq
        %v403 = vshrl.u32 %v402, 7
        %v404 = vsub.s32 0, %v403
        %v405 = vrot.slane %v400, %v404
        %v423 = vunpack.c.l.b16 %v384
        %v424 = vunpack.c.l.b16 %v385
        %v425 = vunpack.c.l.b16 %v386
        %v426 = vunpack.c.l.b16 %v387
        %v427 = vunpack.c.l.b16 %v388
        %v428 = vunpack.c.l.b16 %v389
        %v429 = vunpack.c.l.b16 %v390
        %v430 = vunpack.c.l.b16 %v391
        %v431 = vunpack.c.l.b16 %v392
        %v432 = vunpack.c.l.b16 %v393
        %v433 = vunpack.c.l.b16 %v394
        %v434 = vunpack.c.l.b16 %v395
        %v435 = vunpack.c.l.b16 %v396
        %v436 = vunpack.c.l.b16 %v397
        %v437 = vunpack.c.l.b16 %v398
        %v438 = vunpack.c.l.b16 %v399
        %v439 = vpack.c.b16 %v424, %v423
        %v440 = vpack.c.b16 %v426, %v425
        %v441 = vpack.c.b16 %v428, %v427
        %v442 = vpack.c.b16 %v430, %v429
        %v443 = vpack.c.b16 %v432, %v431
        %v444 = vpack.c.b16 %v434, %v433
        %v445 = vpack.c.b16 %v436, %v435
        %v446 = vpack.c.b16 %v438, %v437
        %455 = vmatprep.subr.bf16.mxu0 0
        %456 = vmatpush1.bf16.msra.mxu0 %v439
        %457 = vmatprep.subr.bf16.mxu0 0
        %458 = vmatpush1.bf16.msra.mxu0 %v440
        %459 = vmatprep.subr.bf16.mxu0 0
        %460 = vmatpush1.bf16.msra.mxu0 %v441
        %461 = vmatprep.subr.bf16.mxu0 0
        %462 = vmatpush1.bf16.msra.mxu0 %v442
        %463 = vmatprep.subr.bf16.mxu0 0
        %464 = vmatpush1.bf16.msra.mxu0 %v443
        %465 = vmatprep.subr.bf16.mxu0 0
        %466 = vmatpush1.bf16.msra.mxu0 %v444
        %467 = vmatprep.subr.bf16.mxu0 0
        %468 = vmatpush1.bf16.msra.mxu0 %v445
        %469 = vmatprep.subr.bf16.mxu0 0
        %470 = vmatpush1.bf16.msra.mxu0 %v446
        %471 = vmatprep.subr.bf16.mxu0 0
        %472 = vmatpush1.bf16.msra.mxu0 0
        %473 = vmatprep.subr.bf16.mxu0 0
        %474 = vmatpush1.bf16.msra.mxu0 0
        %475 = vmatprep.subr.bf16.mxu0 0
        %476 = vmatpush1.bf16.msra.mxu0 0
        %477 = vmatprep.subr.bf16.mxu0 0
        %478 = vmatpush1.bf16.msra.mxu0 0
        %479 = vmatprep.subr.bf16.mxu0 0
        %480 = vmatpush1.bf16.msra.mxu0 0
        %481 = vmatprep.subr.bf16.mxu0 0
        %482 = vmatpush1.bf16.msra.mxu0 0
        %483 = vmatprep.subr.bf16.mxu0 0
        %484 = vmatpush1.bf16.msra.mxu0 0
        %485 = vmatprep.subr.bf16.mxu0 0
        %486 = vmatpush1.bf16.msra.mxu0 0
        %487 = vmatprep.mubr.bf16.mxu0 0
        %488 = vmatmul.mubr.bf16.gmra.mrb[0].mxu0 %v383
        %v489 = vpop.f32.mrb[0].mxu0
        %v490 = vadd.f32 %v405, %v489
        %v491 = vpop.f32.mrb[0].mxu0
        %v492 = vpop.f32.mrb[0].mxu0
        %v493 = vpop.f32.mrb[0].mxu0
        %494 = vdwg.mxu0
        %495 = vmax.xlane.f32.xlu0 %v490
        %v496 = vpop.xlane.xlu0 %495
        %v497 = vsub.f32 %v490, %v496
        %v498 = vmul.f32 %v497, 1.442695
        %v499 = vpow.pop %v498
        %500 = vadd.xlane.f32.xlu0 %v499
        %v501 = vpop.xlane.xlu0 %500
        %v502 = vrcp.pop %v501
        %v503 = vmul.f32 %v499, %v502
        %504 = vst [vmem:[%s268] sm:$0xff] %v503
        %s505 = sand.u32 %s141, 1
        %s506 = scalar_lea.sflag [#allocation4], %s505
        %s507 = sand.u32 %s141, 1
        %s508 = smul.addr %s507, 8
        %s509 = scalar_lea.vmem [#allocation8], %s508
        // Predicated region
        $region53: #{tpu_custom_call.1} parent=39 // pred_check
          %p510 = pneg %p151
        $region54: #{tpu_custom_call.1} parent=39 // pred_check_branch
          %512 = sbr.rel (%p510) target = $region56
        $region55: #{tpu_custom_call.1} parent=39 // pred_region
          %s514 = ssub.s32 128, 128
          %515 = vsyncadd %s506, %s514
          %s516 = smul.addr %s23, 128
          %s517 = scalar_lea.hbm %s5, %s516
          %s519 = sshll.u32 %s509, 4
          %s520 = int_to_ptr.vmem [resolvable:$true] %s519
          %522 = dma.vmem_to_hbm [thread:$0]  %s520, 128, %s517, %s506
        $region56: #{tpu_custom_call.1} parent=39 // pred_fallthru
          _
      $region40: #{tpu_custom_call.1} parent=5 // pred_fallthru
        _
      %p523 = scmp.le.s32.totalorder 2, %s18
      // Predicated region
      $region57: #{tpu_custom_call.1} parent=5 // pred_check
        %p524 = pneg %p523
      $region58: #{tpu_custom_call.1} parent=5 // pred_check_branch
        %526 = sbr.rel (%p524) target = $region60
      $region59: #{tpu_custom_call.1} parent=5 // pred_region
        %s527 = ssub.s32 %s18, 2
        // Predicated region
        $region61: #{tpu_custom_call.1} parent=59 // pred_check
          %p528 = pneg %p157
        $region62: #{tpu_custom_call.1} parent=59 // pred_check_branch
          %530 = sbr.rel (%p528) target = $region64
        $region63: #{tpu_custom_call.1} parent=59 // pred_region
          %s531 = sand.u32 %s142, 1
          %s532 = scalar_lea.sflag [#allocation4], %s531
          %s533 = sand.u32 %s142, 1
          %s534 = smul.addr %s533, 8
          %s535 = scalar_lea.vmem [#allocation8], %s534
          %536 = dma.done %s532, 128
        $region64: #{tpu_custom_call.1} parent=59 // pred_fallthru
          _
      $region60: #{tpu_custom_call.1} parent=5 // pred_fallthru
        _
    $region6: #{tpu_custom_call.1} parent=1 // loop_footer
      %s22 = sadd.s32 1, %s18
    $region7: #{tpu_custom_call.1} parent=1 // loop_footer_branch
      %17 = sbr.rel target = $region3
    $region8: #{tpu_custom_call.1} parent=1 // loop_exit
      _
    %537 = vsyncpa [#allocation3], 1
    %s538 = scalar_lea.sflag [#allocation3], 1
    %539 = vsyncpa %s538, 1
    %540 = vsyncpa [#allocation6], 1
    %541 = vsyncpa [#allocation4], 1
    %s542 = scalar_lea.sflag [#allocation4], 1
    %543 = vsyncpa %s542, 1

</llo_original>
